<compile_context>
chip_gen: v5e
topology: v5e:2x2
jax: 0.10.0
libtpu: 0.0.40
codegen_flags: <defaults>
</compile_context>

<pallas_src>
import functools

import jax
import jax.numpy as jnp
from jax.experimental import pallas as pl
from jax.experimental.pallas import tpu as pltpu


# ---------------------------------------------------------------------------
# Kernels
# ---------------------------------------------------------------------------
def _sample_wt_kernel(wm_ref, wlv_ref, eps_ref, wt_ref):
    """One (j, k) tile: W^T = (w_mean + eps * exp(0.5 * w_logvar))^T in bf16."""
    w = wm_ref[...] + eps_ref[...] * jnp.exp(0.5 * wlv_ref[...])   # (tn, tk) f32
    wt_ref[...] = w.T.astype(jnp.bfloat16)                         # (tk, tn) bf16


def _linear_bias_kernel(x_ref, wt_ref, b_ref, o_ref):
    """One (i, j, k) step of y = x_bf16 @ W^T_bf16 + b, f32 accumulation."""
    k = pl.program_id(2)

    @pl.when(k == 0)
    def _():
        o_ref[...] = jnp.zeros_like(o_ref)

    # Canonical NN matmul on the MXU: (tb, tk) @ (tk, tn), f32 accumulate into
    # the resident output block.
    o_ref[...] += jnp.dot(x_ref[...], wt_ref[...],
                          preferred_element_type=jnp.float32)

    @pl.when(k == pl.num_programs(2) - 1)
    def _():
        o_ref[...] += b_ref[...]          # (1, tn) broadcast over sublanes


# ---------------------------------------------------------------------------
# Tiling helpers
# ---------------------------------------------------------------------------
def _pick_tile(dim, preferred):
    for t in preferred:
        if t <= dim and dim % t == 0:
            return t
    return dim  # full dim — always a legal block shape


def _gemm_tiles(B, K, N, tb, tn, tk):
    auto_tb, auto_tn = tb is None, tn is None
    # tb is the knob that amortizes the (one-time) sampling pass and the
    # weight re-reads: prefer large batch tiles.
    tb = tb or _pick_tile(B, (1024, 512, 256, 128, 64, 32, 16, 8))
    tn = tn or _pick_tile(N, (512, 256, 128))
    tk = tk or _pick_tile(K, (1024, 512, 256, 128))
    # v7x megacore: 2 TensorCores share the parallel grid axes — avoid a 1x1
    # parallel grid when we can split legally (keep (8,128) alignment).
    if (B // tb) * (N // tn) < 2:
        if auto_tb and tb % 16 == 0 and B % (tb // 2) == 0:
            tb //= 2
        elif auto_tn and tn % 256 == 0 and N % (tn // 2) == 0:
            tn //= 2
    return tb, tn, tk


def _gemm_vmem_limit(tb, tn, tk):
    # Double-buffered bf16 operand tiles + bias, double-buffered f32 resident
    # output, plus an f32 temp for the MXU result.  Only override the 32 MiB
    # scoped default when needed; cap at 48 MiB (headroom on v7x's 64 MiB).
    est = 2 * (tb * tk * 2 + tk * tn * 2 + tn * 4) + 3 * tb * tn * 4
    if est <= 24 * 1024 * 1024:
        return None
    return int(min(est + (8 << 20), 48 << 20))


# ---------------------------------------------------------------------------
# pallas_call wrappers
# ---------------------------------------------------------------------------
def _sample_weights_t(w_mean, w_logvar, eps_w, *, tsn=None, tsk=None):
    """Pass 1: one elementwise sweep producing bf16 W^T of shape (K, N)."""
    N, K = w_mean.shape
    tsn = tsn or _pick_tile(N, (256, 128))
    tsk = tsk or _pick_tile(K, (256, 128))
    if N % tsn or K % tsk:
        raise ValueError("sampling tile sizes must divide the weight dims")
    grid = (N // tsn, K // tsk)

    grid_spec = pltpu.PrefetchScalarGridSpec(
        num_scalar_prefetch=0,
        grid=grid,
        in_specs=[
            pl.BlockSpec((tsn, tsk), lambda j, k: (j, k)),   # w_mean
            pl.BlockSpec((tsn, tsk), lambda j, k: (j, k)),   # w_logvar
            pl.BlockSpec((tsn, tsk), lambda j, k: (j, k)),   # eps
        ],
        out_specs=pl.BlockSpec((tsk, tsn), lambda j, k: (k, j)),
    )
    cost = pl.CostEstimate(flops=3 * N * K, transcendentals=N * K,
                           bytes_accessed=3 * N * K * 4 + N * K * 2)
    return pl.pallas_call(
        _sample_wt_kernel,
        out_shape=jax.ShapeDtypeStruct((K, N), jnp.bfloat16),
        grid_spec=grid_spec,
        compiler_params=pltpu.CompilerParams(
            dimension_semantics=("parallel", "parallel")),
        cost_estimate=cost,
    )(w_mean, w_logvar, eps_w)


def _linear(x_bf16, wt_bf16, b_f32, *, tb=None, tn=None, tk=None):
    """Pass 2: y = x_bf16 @ W^T_bf16 + b with f32 accumulation."""
    B, K = x_bf16.shape
    _, N = wt_bf16.shape
    tb, tn, tk = _gemm_tiles(B, K, N, tb, tn, tk)
    if B % tb or N % tn or K % tk:
        raise ValueError("GEMM tile sizes must divide the array dims")
    grid = (B // tb, N // tn, K // tk)

    grid_spec = pltpu.PrefetchScalarGridSpec(
        num_scalar_prefetch=0,
        grid=grid,
        in_specs=[
            pl.BlockSpec((tb, tk), lambda i, j, k: (i, k)),   # x (bf16)
            pl.BlockSpec((tk, tn), lambda i, j, k: (k, j)),   # W^T (bf16)
            pl.BlockSpec((1, tn), lambda i, j, k: (0, j)),    # bias (f32)
        ],
        out_specs=pl.BlockSpec((tb, tn), lambda i, j, k: (i, j)),
    )
    cost = pl.CostEstimate(
        flops=2 * B * N * K,
        transcendentals=0,
        bytes_accessed=(N // tn) * B * K * 2 + (B // tb) * N * K * 2
                       + N * 4 + B * N * 4)
    return pl.pallas_call(
        _linear_bias_kernel,
        out_shape=jax.ShapeDtypeStruct((B, N), jnp.float32),
        grid_spec=grid_spec,
        compiler_params=pltpu.CompilerParams(
            dimension_semantics=("parallel", "parallel", "arbitrary"),
            vmem_limit_bytes=_gemm_vmem_limit(tb, tn, tk)),
        cost_estimate=cost,
    )(x_bf16, wt_bf16, b_f32)


@functools.partial(jax.jit,
                   static_argnames=("sample", "tb", "tn", "tk", "tsn", "tsk"))
def nstepkl_bayesian_linear_forward(x, w_mean, w_logvar, b_mean, b_logvar,
                                    seed, *, sample=True,
                                    tb=None, tn=None, tk=None,
                                    tsn=None, tsk=None):
    """Forward of NStepKLVCLBayesianLinear.

    x: (..., K) f32; w_*: (N, K) f32 (PyTorch (out, in) layout);
    b_*: (N,) or (1, N) f32; seed: int used for the reparameterization noise.
    Returns (..., N) f32.
    """
    K = x.shape[-1]
    x2 = x.reshape(-1, K)
    N = w_mean.shape[0]
    b_mean = b_mean.reshape(1, -1)
    b_logvar = b_logvar.reshape(1, -1)

    if sample:
        # One weight/bias draw per forward (shared by the whole batch), drawn
        # deterministically from `seed` and independent of tile sizes.
        key = jax.random.PRNGKey(seed)
        kw, kb = jax.random.split(key)
        eps_w = jax.random.normal(kw, (N, K), jnp.float32)
        eps_b = jax.random.normal(kb, (1, N), jnp.float32)
        wt = _sample_weights_t(w_mean, w_logvar, eps_w, tsn=tsn, tsk=tsk)
        b = b_mean + eps_b * jnp.exp(0.5 * b_logvar)       # tiny: plain XLA
    else:
        # Deterministic fast path: mean weights, one-time XLA transpose+cast.
        wt = w_mean.T.astype(jnp.bfloat16)
        b = b_mean

    y = _linear(x2.astype(jnp.bfloat16), wt, b.astype(jnp.float32),
                tb=tb, tn=tn, tk=tk)
    return y.reshape(x.shape[:-1] + (N,))


# TODO(synk): posterior_kl_div / update_posterior / MeanFieldGaussian prev-post
# bookkeeping are training-time scalar-KL / parameter-copy utilities, not part
# of forward(); they are left to plain JAX and not implemented as kernels here.


# ---------------------------------------------------------------------------
# Demo / checks
# ---------------------------------------------------------------------------
if __name__ == "__main__":
    input_size, output_size, batch = 256, 256, 128
    lambda_logvar = -5.0

    key = jax.random.PRNGKey(0)
    kw, kb, kx = jax.random.split(key, 3)

    w_mean = 0.1 * jax.random.normal(kw, (output_size, input_size), jnp.float32)
    w_logvar = jnp.full((output_size, input_size), lambda_logvar, jnp.float32)
    b_mean = 0.1 * jax.random.normal(kb, (1, output_size), jnp.float32)
    b_logvar = jnp.full((1, output_size), lambda_logvar, jnp.float32)
    x = jax.random.normal(kx, (batch, input_size), jnp.float32)

    # Force tiling of every grid axis at this small size:
    #   GEMM grid = (2, 2, 2), sampling grid = (2, 2).
    tiles = dict(tb=64, tn=128, tk=128, tsn=128, tsk=128)

    # --- sample=False fast path: deterministic, checked against a reference.
    y_det = nstepkl_bayesian_linear_forward(
        x, w_mean, w_logvar, b_mean, b_logvar, 0, sample=False, **tiles)
    y_det = jax.block_until_ready(y_det)
    ref_det = jnp.dot(x.astype(jnp.bfloat16), w_mean.T.astype(jnp.bfloat16),
                      preferred_element_type=jnp.float32) + b_mean
    assert y_det.shape == (batch, output_size)
    assert jnp.allclose(y_det, ref_det, atol=2e-2, rtol=2e-2), \
        float(jnp.max(jnp.abs(y_det - ref_det)))

    # --- sample=True path: validated statistically against the analytic
    # output distribution y ~ N(x @ w_mean.T + b_mean, sum_k x^2 e^lv + e^lv).
    y_s = nstepkl_bayesian_linear_forward(
        x, w_mean, w_logvar, b_mean, b_logvar, 1234, sample=True, **tiles)
    y_s = jax.block_until_ready(y_s)
    assert y_s.shape == (batch, output_size)
    assert bool(jnp.all(jnp.isfinite(y_s)))

    mean_out = x @ w_mean.T + b_mean
    var = (jnp.sum(x * x, axis=1, keepdims=True) + 1.0) * jnp.exp(lambda_logvar)
    z = (y_s - mean_out) / jnp.sqrt(var)
    assert abs(float(jnp.mean(z))) < 0.25, float(jnp.mean(z))
    assert 0.5 < float(jnp.std(z)) < 2.0, float(jnp.std(z))

    # Same seed reproduces the draw; a different seed changes it.
    y_s2 = jax.block_until_ready(nstepkl_bayesian_linear_forward(
        x, w_mean, w_logvar, b_mean, b_logvar, 1234, sample=True, **tiles))
    y_s3 = jax.block_until_ready(nstepkl_bayesian_linear_forward(
        x, w_mean, w_logvar, b_mean, b_logvar, 4321, sample=True, **tiles))
    assert jnp.allclose(y_s, y_s2)
    assert not jnp.allclose(y_s, y_s3)

    # Default (auto) tiles also work.
    y_auto = jax.block_until_ready(nstepkl_bayesian_linear_forward(
        x, w_mean, w_logvar, b_mean, b_logvar, 1234, sample=True))
    assert y_auto.shape == (batch, output_size)
    assert bool(jnp.all(jnp.isfinite(y_auto)))

    print("KERNEL_OK")
</pallas_src>

<mosaic_0001>
module attributes {stable_mosaic.version = 11 : i64} {
  func.func @_linear_bias_kernel(%arg0: i32, %arg1: i32, %arg2: i32, %arg3: memref<64x128xbf16, #tpu.memory_space<vmem>>, %arg4: memref<128x128xbf16, #tpu.memory_space<vmem>>, %arg5: memref<1x128xf32, #tpu.memory_space<vmem>>, %arg6: memref<64x128xf32, #tpu.memory_space<vmem>>) attributes {dimension_semantics = [#tpu.dimension_semantics<parallel>, #tpu.dimension_semantics<parallel>, #tpu.dimension_semantics<arbitrary>], iteration_bounds = array<i64: 2, 2, 2>, scalar_prefetch = 0 : i64, scratch_operands = 0 : i64, tpu.core_type = #tpu.core_type<tc>, window_params = [{transform_indices = @transform_0, window_bounds = array<i64: 64, 128>}, {transform_indices = @transform_1, window_bounds = array<i64: 128, 128>}, {transform_indices = @transform_2, window_bounds = array<i64: 1, 128>}, {transform_indices = @transform_3, window_bounds = array<i64: 64, 128>}]} {
    %c0_i32 = arith.constant 0 : i32
    %0 = arith.cmpi eq, %arg2, %c0_i32 : i32
    %1 = arith.extui %0 : i1 to i32
    %c0_i32_0 = arith.constant 0 : i32
    %2 = arith.cmpi ne, %1, %c0_i32_0 : i32
    scf.if %2 {
      %cst_9 = arith.constant 0.000000e+00 : f32
      %12 = vector.broadcast %cst_9 : f32 to vector<64x128xf32>
      %c0_10 = arith.constant 0 : index
      %c0_11 = arith.constant 0 : index
      %13 = vector.load %arg6[%c0_10, %c0_11] : memref<64x128xf32, #tpu.memory_space<vmem>>, vector<64x128xf32>
      tpu.vector_store %arg6[%c0_10, %c0_11], %12 {strides = array<i32>} : memref<64x128xf32, #tpu.memory_space<vmem>>, vector<64x128xf32>,
    } else {
    }
    %c0 = arith.constant 0 : index
    %c0_1 = arith.constant 0 : index
    %3 = vector.load %arg6[%c0, %c0_1] : memref<64x128xf32, #tpu.memory_space<vmem>>, vector<64x128xf32>
    %c0_2 = arith.constant 0 : index
    %c0_3 = arith.constant 0 : index
    %4 = vector.load %arg3[%c0_2, %c0_3] : memref<64x128xbf16, #tpu.memory_space<vmem>>, vector<64x128xbf16>
    %c0_4 = arith.constant 0 : index
    %c0_5 = arith.constant 0 : index
    %5 = vector.load %arg4[%c0_4, %c0_5] : memref<128x128xbf16, #tpu.memory_space<vmem>>, vector<128x128xbf16>
    %cst = arith.constant dense<0.000000e+00> : vector<64x128xf32>
    %6 = tpu.matmul %4, %5, %cst {dimension_numbers = #tpu.dot_dimension_numbers<[1], [0], [0], [1], [0, 0, 1, 1], [], []>} : vector<64x128xbf16>, vector<128x128xbf16>, vector<64x128xf32> -> vector<64x128xf32>
    %7 = arith.addf %3, %6 : vector<64x128xf32>
    %c0_6 = arith.constant 0 : index
    %c0_7 = arith.constant 0 : index
    %8 = vector.load %arg6[%c0_6, %c0_7] : memref<64x128xf32, #tpu.memory_space<vmem>>, vector<64x128xf32>
    tpu.vector_store %arg6[%c0_6, %c0_7], %7 {strides = array<i32>} : memref<64x128xf32, #tpu.memory_space<vmem>>, vector<64x128xf32>,
    %c1_i32 = arith.constant 1 : i32
    %9 = arith.cmpi eq, %arg2, %c1_i32 : i32
    %10 = arith.extui %9 : i1 to i32
    %c0_i32_8 = arith.constant 0 : i32
    %11 = arith.cmpi ne, %10, %c0_i32_8 : i32
    scf.if %11 {
      %c0_9 = arith.constant 0 : index
      %c0_10 = arith.constant 0 : index
      %12 = vector.load %arg6[%c0_9, %c0_10] : memref<64x128xf32, #tpu.memory_space<vmem>>, vector<64x128xf32>
      %c0_11 = arith.constant 0 : index
      %c0_12 = arith.constant 0 : index
      %13 = vector.load %arg5[%c0_11, %c0_12] : memref<1x128xf32, #tpu.memory_space<vmem>>, vector<1x128xf32>
      %14 = vector.broadcast %13 : vector<1x128xf32> to vector<64x128xf32>
      %15 = arith.addf %12, %14 : vector<64x128xf32>
      %c0_13 = arith.constant 0 : index
      %c0_14 = arith.constant 0 : index
      %16 = vector.load %arg6[%c0_13, %c0_14] : memref<64x128xf32, #tpu.memory_space<vmem>>, vector<64x128xf32>
      tpu.vector_store %arg6[%c0_13, %c0_14], %15 {strides = array<i32>} : memref<64x128xf32, #tpu.memory_space<vmem>>, vector<64x128xf32>,
    } else {
    }
    return
  }
  func.func @transform_0(%arg0: i32, %arg1: i32, %arg2: i32) -> (i32, i32) {
    %c0_i32 = arith.constant 0 : i32
    return %arg0, %arg2 : i32, i32
  }
  func.func @transform_1(%arg0: i32, %arg1: i32, %arg2: i32) -> (i32, i32) {
    %c0_i32 = arith.constant 0 : i32
    return %arg2, %arg1 : i32, i32
  }
  func.func @transform_2(%arg0: i32, %arg1: i32, %arg2: i32) -> (i32, i32) {
    %c0_i32 = arith.constant 0 : i32
    %c0_i32_0 = arith.constant 0 : i32
    return %c0_i32, %arg1 : i32, i32
  }
  func.func @transform_3(%arg0: i32, %arg1: i32, %arg2: i32) -> (i32, i32) {
    %c0_i32 = arith.constant 0 : i32
    return %arg0, %arg1 : i32, i32
  }
}

</mosaic_0001>

<llo_original>
// kernel: nstepkl_bayesian_linear_forward.1
$region0: #{nstepkl_bayesian_linear_forward.1}
  #allocation0 [shape = 'u32[]', space=smem, size = 0x4, offset = 0x4, fixed_abs, tag = 'smem constant byte address 0x4 - core index']
  #allocation1 [shape = 'u32[72,128]{1,0:T(1,128)}', space=vmem, size = 0x9000, scoped, tag = 'internal scratch']
  %s0 = inlined_call_operand.vmem [shape: bf16[128,256], index: 0, kind: input, shape index: {}]
  %s1 = inlined_call_operand.vmem [shape: bf16[256,256], index: 1, kind: input, shape index: {}]
  %s2 = inlined_call_operand.vmem [shape: f32[1,256], index: 2, kind: input, shape index: {}]
  %s3 = inlined_call_operand.hbm [shape: f32[128,256], index: 3, kind: output, shape index: {}]
  %s4 = sld [smem:[#allocation0]]
  $region135: #{nstepkl_bayesian_linear_forward.1} parent=0
    _
  %s6 = ssub.s32 1, %s4
  %s7 = scalar_select 0, %s6, %s4
  $region1: #{nstepkl_bayesian_linear_forward.1} parent=0
    #allocation2 [shape = 'u8[32768]{0}', space=vmem, size = 0x8000, scoped, tag = 'input window, operand 0']
    #allocation3 [shape = 'u8[65536]{0}', space=vmem, size = 0x10000, scoped, tag = 'input window, operand 1']
    #allocation4 [shape = 'u8[65536]{0}', space=vmem, size = 0x10000, scoped, tag = 'output window, operand 0']
    #allocation5 [shape = 's32[2]{0}', space=sflag, size = 0x8, scoped, tag = 'scoped memory for nstepkl_bayesian_linear_forward.1']
    %8 = vsyncpa [#allocation5], 0
    %s9 = scalar_lea.sflag [#allocation5], 1
    %10 = vsyncpa %s9, 0
    loop: start=0, step=1, limit=10
    $region2: #{nstepkl_bayesian_linear_forward.1} parent=1 // loop_pre_header
      _
    $region3: #{nstepkl_bayesian_linear_forward.1} parent=1 // loop_header
      %s12 = sphi 0, %s16
      %p13 = scmp.ge.s32.totalorder %s12, 10
      %s19 = sphi 0, %s38
      %s20 = sphi 0, %s34
      %s21 = sphi 0, %s30
      %s22 = sphi 0, %s19
      %s23 = sphi 0, %s20
      %s24 = sphi 0, %s21
      %s25 = sphi 0, %s22
      %s26 = sphi 0, %s23
      %s27 = sphi 0, %s24
      %s43 = sphi 0, %s45
      %s46 = sphi 0, %s43
      %s47 = sphi 0, %s46
      %s63 = sphi 0, %s47
      %s71 = sphi 0, %s73
      %s74 = sphi 0, %s71
      %s75 = sphi 0, %s74
      %s91 = sphi 0, %s75
      %s97 = sphi 0, %s99
      %s100 = sphi 0, %s97
      %s101 = sphi 0, %s100
      %s117 = sphi 0, %s101
      %s125 = sphi 0, %s127
      %s128 = sphi 0, %s125
      %s129 = sphi 0, %s128
      %s145 = sphi 0, %s129
    $region4: #{nstepkl_bayesian_linear_forward.1} parent=1 // loop_header_branch
      %15 = sbr.rel (%p13) target = $region8
    $region5: #{nstepkl_bayesian_linear_forward.1} parent=1 // loop_body
      %s17 = ssub.s32 %s12, 1
      %s18 = ssub.s32 %s12, 2
      %s28 = sadd.s32 1, %s21
      %p29 = scmp.ge.s32.totalorder %s28, 2
      %s30 = scalar_select %p29, 0, %s28
      %s31 = sadd.s32 1, %s20
      %s32 = scalar_select %p29, %s31, %s20
      %p33 = scmp.ge.s32.totalorder %s32, 2
      %s34 = scalar_select %p33, 0, %s32
      %s35 = sadd.s32 1, %s19
      %s36 = scalar_select %p33, %s35, %s19
      %p37 = scmp.ge.s32.totalorder %s36, 2
      %s38 = scalar_select %p37, 0, %s36
      %s39 = ssub.s32 %s19, %s38
      %s40 = ssub.s32 %s21, %s30
      %s41 = sor.u32 %s39, %s40
      %p42 = scmp.eq.s32.totalorder %s41, 0
      %s44 = sadd.s32 %s43, 1
      %s45 = scalar_select %p42, %s43, %s44
      %p48 = pneg %p42
      %p49 = scmp.eq.s32.totalorder %s12, 7
      %p50 = por %p48, %p49
      %p51 = scmp.ne.s32.totalorder %s43, %s46
      %p52 = scmp.eq.s32.totalorder %s12, 0
      %p53 = por %p51, %p52
      %p54 = scmp.ne.s32.totalorder %s43, %s46
      %p55 = scmp.eq.s32.totalorder %s17, 7
      %p56 = por %p54, %p55
      %p57 = scmp.ne.s32.totalorder %s46, %s47
      %p58 = scmp.eq.s32.totalorder %s17, 0
      %p59 = por %p57, %p58
      %p60 = scmp.ne.s32.totalorder %s46, %s47
      %p61 = scmp.eq.s32.totalorder %s18, 7
      %p62 = por %p60, %p61
      %p64 = scmp.ne.s32.totalorder %s47, %s63
      %p65 = scmp.eq.s32.totalorder %s18, 0
      %p66 = por %p64, %p65
      %s67 = ssub.s32 %s21, %s30
      %s68 = ssub.s32 %s20, %s34
      %s69 = sor.u32 %s67, %s68
      %p70 = scmp.eq.s32.totalorder %s69, 0
      %s72 = sadd.s32 %s71, 1
      %s73 = scalar_select %p70, %s71, %s72
      %p76 = pneg %p70
      %p77 = scmp.eq.s32.totalorder %s12, 7
      %p78 = por %p76, %p77
      %p79 = scmp.ne.s32.totalorder %s71, %s74
      %p80 = scmp.eq.s32.totalorder %s12, 0
      %p81 = por %p79, %p80
      %p82 = scmp.ne.s32.totalorder %s71, %s74
      %p83 = scmp.eq.s32.totalorder %s17, 7
      %p84 = por %p82, %p83
      %p85 = scmp.ne.s32.totalorder %s74, %s75
      %p86 = scmp.eq.s32.totalorder %s17, 0
      %p87 = por %p85, %p86
      %p88 = scmp.ne.s32.totalorder %s74, %s75
      %p89 = scmp.eq.s32.totalorder %s18, 7
      %p90 = por %p88, %p89
      %p92 = scmp.ne.s32.totalorder %s75, %s91
      %p93 = scmp.eq.s32.totalorder %s18, 0
      %p94 = por %p92, %p93
      %s95 = ssub.s32 %s20, %s34
      %p96 = scmp.eq.s32.totalorder %s95, 0
      %s98 = sadd.s32 %s97, 1
      %s99 = scalar_select %p96, %s97, %s98
      %p102 = pneg %p96
      %p103 = scmp.eq.s32.totalorder %s12, 7
      %p104 = por %p102, %p103
      %p105 = scmp.ne.s32.totalorder %s97, %s100
      %p106 = scmp.eq.s32.totalorder %s12, 0
      %p107 = por %p105, %p106
      %p108 = scmp.ne.s32.totalorder %s97, %s100
      %p109 = scmp.eq.s32.totalorder %s17, 7
      %p110 = por %p108, %p109
      %p111 = scmp.ne.s32.totalorder %s100, %s101
      %p112 = scmp.eq.s32.totalorder %s17, 0
      %p113 = por %p111, %p112
      %p114 = scmp.ne.s32.totalorder %s100, %s101
      %p115 = scmp.eq.s32.totalorder %s18, 7
      %p116 = por %p114, %p115
      %p118 = scmp.ne.s32.totalorder %s101, %s117
      %p119 = scmp.eq.s32.totalorder %s18, 0
      %p120 = por %p118, %p119
      %s121 = ssub.s32 %s19, %s38
      %s122 = ssub.s32 %s20, %s34
      %s123 = sor.u32 %s121, %s122
      %p124 = scmp.eq.s32.totalorder %s123, 0
      %s126 = sadd.s32 %s125, 1
      %s127 = scalar_select %p124, %s125, %s126
      %p130 = pneg %p124
      %p131 = scmp.eq.s32.totalorder %s12, 7
      %p132 = por %p130, %p131
      %p133 = scmp.ne.s32.totalorder %s125, %s128
      %p134 = scmp.eq.s32.totalorder %s12, 0
      %p135 = por %p133, %p134
      %p136 = scmp.ne.s32.totalorder %s125, %s128
      %p137 = scmp.eq.s32.totalorder %s17, 7
      %p138 = por %p136, %p137
      %p139 = scmp.ne.s32.totalorder %s128, %s129
      %p140 = scmp.eq.s32.totalorder %s17, 0
      %p141 = por %p139, %p140
      %p142 = scmp.ne.s32.totalorder %s128, %s129
      %p143 = scmp.eq.s32.totalorder %s18, 7
      %p144 = por %p142, %p143
      %p146 = scmp.ne.s32.totalorder %s129, %s145
      %p147 = scmp.eq.s32.totalorder %s18, 0
      %p148 = por %p146, %p147
      %p149 = scmp.le.s32.totalorder 1, %s12
      %p150 = scmp.lt.s32.totalorder %s12, 9
      %p151 = pnand %p149, %p150
      %p152 = pneg %p151
      // Predicated region
      $region9: #{nstepkl_bayesian_linear_forward.1} parent=5 // pred_check
        _
      $region10: #{nstepkl_bayesian_linear_forward.1} parent=5 // pred_check_branch
        %154 = sbr.rel (%p151) target = $region12
      $region11: #{nstepkl_bayesian_linear_forward.1} parent=5 // pred_region
        %s155 = ssub.s32 %s12, 1
      $region12: #{nstepkl_bayesian_linear_forward.1} parent=5 // pred_fallthru
        _
      %p156 = scmp.lt.s32.totalorder %s12, 8
      // Predicated region
      $region13: #{nstepkl_bayesian_linear_forward.1} parent=5 // pred_check
        %p157 = pneg %p156
      $region14: #{nstepkl_bayesian_linear_forward.1} parent=5 // pred_check_branch
        %159 = sbr.rel (%p157) target = $region16
      $region15: #{nstepkl_bayesian_linear_forward.1} parent=5 // pred_region
        // Predicated region
        $region17: #{nstepkl_bayesian_linear_forward.1} parent=15 // pred_check
          %p160 = pneg %p53
        $region18: #{nstepkl_bayesian_linear_forward.1} parent=15 // pred_check_branch
          %162 = sbr.rel (%p160) target = $region20
        $region19: #{nstepkl_bayesian_linear_forward.1} parent=15 // pred_region
          %s163 = sand.u32 %s43, 1
          %s164 = sand.u32 %s43, 1
          %s165 = smul.addr %s164, 32
          %s166 = scalar_lea.vmem [#allocation2], %s165
          %s167 = smul.u32 8, %s19
          %s168 = smul.addr %s167, 2
          %s169 = sadd.s32 %s21, %s168
          %s170 = smul.addr %s169, 4
          %s171 = scalar_lea.vmem %s0, %s170
          // Predicated region
          $region21: #{nstepkl_bayesian_linear_forward.1} parent=19 // pred_check
            _
          $region22: #{nstepkl_bayesian_linear_forward.1} parent=19 // pred_check_branch
            %173 = sbr.rel (0) target = $region24
          $region23: #{nstepkl_bayesian_linear_forward.1} parent=19 // pred_region
            // Predicated region
            $region25: #{nstepkl_bayesian_linear_forward.1} parent=23 // pred_check
              _
            $region26: #{nstepkl_bayesian_linear_forward.1} parent=23 // pred_check_branch
              %175 = sbr.rel target = $region28
            $region27: #{nstepkl_bayesian_linear_forward.1} parent=23 // pred_region
              // Predicated region
              $region40: #{nstepkl_bayesian_linear_forward.1} parent=27 // pred_check
                _
              $region41: #{nstepkl_bayesian_linear_forward.1} parent=27 // pred_check_branch
                %205 = sbr.rel (0) target = $region43
              $region42: #{nstepkl_bayesian_linear_forward.1} parent=27 // pred_region
                loop: start=0, step=1, limit=1
                $region44: #{nstepkl_bayesian_linear_forward.1} parent=42 // loop_pre_header
                  _
                $region45: #{nstepkl_bayesian_linear_forward.1} parent=42 // loop_header
                  %s207 = sphi 0, %s211
                  %p208 = scmp.ge.s32.totalorder %s207, 1
                  %s212 = sphi %s171, %s171
                  %s213 = sphi %s166, %s166
                $region46: #{nstepkl_bayesian_linear_forward.1} parent=42 // loop_header_branch
                  %210 = sbr.rel (%p208) target = $region50
                $region47: #{nstepkl_bayesian_linear_forward.1} parent=42 // loop_body
                  _
                $region48: #{nstepkl_bayesian_linear_forward.1} parent=42 // loop_footer
                  %s211 = sadd.s32 1, %s207
                $region49: #{nstepkl_bayesian_linear_forward.1} parent=42 // loop_footer_branch
                  %206 = sbr.rel target = $region45
                $region50: #{nstepkl_bayesian_linear_forward.1} parent=42 // loop_exit
                  _
                %s215 = ssub.s32 16, 1
                loop: start=0, step=1, limit=1
                $region51: #{nstepkl_bayesian_linear_forward.1} parent=42 // loop_pre_header
                  _
                $region52: #{nstepkl_bayesian_linear_forward.1} parent=42 // loop_header
                  %s217 = sphi 0, %s221
                  %p218 = scmp.ge.s32.totalorder %s217, 1
                  %s222 = sphi %s171, %s171
                  %s223 = sphi %s166, %s166
                $region53: #{nstepkl_bayesian_linear_forward.1} parent=42 // loop_header_branch
                  %220 = sbr.rel (%p218) target = $region57
                $region54: #{nstepkl_bayesian_linear_forward.1} parent=42 // loop_body
                  %v224 = vld [vmem:[%s222] sm:%s215]
                  %225 = vst [vmem:[%s223] sm:%s215] %v224
                  %v226 = vld [vmem:[%s222 + $0x8] sm:%s215]
                  %227 = vst [vmem:[%s223 + $0x4] sm:%s215] %v226
                  %v228 = vld [vmem:[%s222 + $0x10] sm:%s215]
                  %229 = vst [vmem:[%s223 + $0x8] sm:%s215] %v228
                  %v230 = vld [vmem:[%s222 + $0x18] sm:%s215]
                  %231 = vst [vmem:[%s223 + $0xc] sm:%s215] %v230
                  %v232 = vld [vmem:[%s222 + $0x20] sm:%s215]
                  %233 = vst [vmem:[%s223 + $0x10] sm:%s215] %v232
                  %v234 = vld [vmem:[%s222 + $0x28] sm:%s215]
                  %235 = vst [vmem:[%s223 + $0x14] sm:%s215] %v234
                  %v236 = vld [vmem:[%s222 + $0x30] sm:%s215]
                  %237 = vst [vmem:[%s223 + $0x18] sm:%s215] %v236
                  %v238 = vld [vmem:[%s222 + $0x38] sm:%s215]
                  %239 = vst [vmem:[%s223 + $0x1c] sm:%s215] %v238
                $region55: #{nstepkl_bayesian_linear_forward.1} parent=42 // loop_footer
                  %s221 = sadd.s32 1, %s217
                $region56: #{nstepkl_bayesian_linear_forward.1} parent=42 // loop_footer_branch
                  %216 = sbr.rel target = $region52
                $region57: #{nstepkl_bayesian_linear_forward.1} parent=42 // loop_exit
                  _
              $region43: #{nstepkl_bayesian_linear_forward.1} parent=27 // pred_fallthru
                _
            $region28: #{nstepkl_bayesian_linear_forward.1} parent=23 // pred_fallthru
              _
            // Predicated region
            $region29: #{nstepkl_bayesian_linear_forward.1} parent=23 // pred_check
              _
            $region30: #{nstepkl_bayesian_linear_forward.1} parent=23 // pred_check_branch
              %177 = sbr.rel (0) target = $region32
            $region31: #{nstepkl_bayesian_linear_forward.1} parent=23 // pred_region
              %s179 = ssub.s32 16, 1
              loop: start=0, step=1, limit=1
              $region33: #{nstepkl_bayesian_linear_forward.1} parent=31 // loop_pre_header
                _
              $region34: #{nstepkl_bayesian_linear_forward.1} parent=31 // loop_header
                %s181 = sphi 0, %s185
                %p182 = scmp.ge.s32.totalorder %s181, 1
                %s186 = sphi %s171, %s171
                %s187 = sphi %s166, %s166
              $region35: #{nstepkl_bayesian_linear_forward.1} parent=31 // loop_header_branch
                %184 = sbr.rel (%p182) target = $region39
              $region36: #{nstepkl_bayesian_linear_forward.1} parent=31 // loop_body
                %v188 = vld [vmem:[%s186] sm:%s179]
                %189 = vst [vmem:[%s187] sm:%s179] %v188
                %v190 = vld [vmem:[%s186 + $0x8] sm:%s179]
                %191 = vst [vmem:[%s187 + $0x4] sm:%s179] %v190
                %v192 = vld [vmem:[%s186 + $0x10] sm:%s179]
                %193 = vst [vmem:[%s187 + $0x8] sm:%s179] %v192
                %v194 = vld [vmem:[%s186 + $0x18] sm:%s179]
                %195 = vst [vmem:[%s187 + $0xc] sm:%s179] %v194
                %v196 = vld [vmem:[%s186 + $0x20] sm:%s179]
                %197 = vst [vmem:[%s187 + $0x10] sm:%s179] %v196
                %v198 = vld [vmem:[%s186 + $0x28] sm:%s179]
                %199 = vst [vmem:[%s187 + $0x14] sm:%s179] %v198
                %v200 = vld [vmem:[%s186 + $0x30] sm:%s179]
                %201 = vst [vmem:[%s187 + $0x18] sm:%s179] %v200
                %v202 = vld [vmem:[%s186 + $0x38] sm:%s179]
                %203 = vst [vmem:[%s187 + $0x1c] sm:%s179] %v202
              $region37: #{nstepkl_bayesian_linear_forward.1} parent=31 // loop_footer
                %s185 = sadd.s32 1, %s181
              $region38: #{nstepkl_bayesian_linear_forward.1} parent=31 // loop_footer_branch
                %180 = sbr.rel target = $region34
              $region39: #{nstepkl_bayesian_linear_forward.1} parent=31 // loop_exit
                _
            $region32: #{nstepkl_bayesian_linear_forward.1} parent=23 // pred_fallthru
              _
          $region24: #{nstepkl_bayesian_linear_forward.1} parent=19 // pred_fallthru
            _
          %240 = vnop
        $region20: #{nstepkl_bayesian_linear_forward.1} parent=15 // pred_fallthru
          _
        // Predicated region
        $region58: #{nstepkl_bayesian_linear_forward.1} parent=15 // pred_check
          %p241 = pneg %p81
        $region59: #{nstepkl_bayesian_linear_forward.1} parent=15 // pred_check_branch
          %243 = sbr.rel (%p241) target = $region61
        $region60: #{nstepkl_bayesian_linear_forward.1} parent=15 // pred_region
          %s244 = sand.u32 %s71, 1
          %s245 = sand.u32 %s71, 1
          %s246 = smul.addr %s245, 64
          %s247 = scalar_lea.vmem [#allocation3], %s246
          %s248 = smul.u32 16, %s21
          %s249 = smul.addr %s248, 2
          %s250 = sadd.s32 %s20, %s249
          %s251 = smul.addr %s250, 4
          %s252 = scalar_lea.vmem %s1, %s251
          // Predicated region
          $region62: #{nstepkl_bayesian_linear_forward.1} parent=60 // pred_check
            _
          $region63: #{nstepkl_bayesian_linear_forward.1} parent=60 // pred_check_branch
            %254 = sbr.rel (0) target = $region65
          $region64: #{nstepkl_bayesian_linear_forward.1} parent=60 // pred_region
            // Predicated region
            $region66: #{nstepkl_bayesian_linear_forward.1} parent=64 // pred_check
              _
            $region67: #{nstepkl_bayesian_linear_forward.1} parent=64 // pred_check_branch
              %256 = sbr.rel target = $region69
            $region68: #{nstepkl_bayesian_linear_forward.1} parent=64 // pred_region
              // Predicated region
              $region81: #{nstepkl_bayesian_linear_forward.1} parent=68 // pred_check
                _
              $region82: #{nstepkl_bayesian_linear_forward.1} parent=68 // pred_check_branch
                %302 = sbr.rel (0) target = $region84
              $region83: #{nstepkl_bayesian_linear_forward.1} parent=68 // pred_region
                loop: start=0, step=1, limit=1
                $region85: #{nstepkl_bayesian_linear_forward.1} parent=83 // loop_pre_header
                  _
                $region86: #{nstepkl_bayesian_linear_forward.1} parent=83 // loop_header
                  %s304 = sphi 0, %s308
                  %p305 = scmp.ge.s32.totalorder %s304, 1
                  %s309 = sphi %s252, %s252
                  %s310 = sphi %s247, %s247
                $region87: #{nstepkl_bayesian_linear_forward.1} parent=83 // loop_header_branch
                  %307 = sbr.rel (%p305) target = $region91
                $region88: #{nstepkl_bayesian_linear_forward.1} parent=83 // loop_body
                  _
                $region89: #{nstepkl_bayesian_linear_forward.1} parent=83 // loop_footer
                  %s308 = sadd.s32 1, %s304
                $region90: #{nstepkl_bayesian_linear_forward.1} parent=83 // loop_footer_branch
                  %303 = sbr.rel target = $region86
                $region91: #{nstepkl_bayesian_linear_forward.1} parent=83 // loop_exit
                  _
                %s312 = ssub.s32 16, 1
                loop: start=0, step=1, limit=1
                $region92: #{nstepkl_bayesian_linear_forward.1} parent=83 // loop_pre_header
                  _
                $region93: #{nstepkl_bayesian_linear_forward.1} parent=83 // loop_header
                  %s314 = sphi 0, %s318
                  %p315 = scmp.ge.s32.totalorder %s314, 1
                  %s319 = sphi %s252, %s252
                  %s320 = sphi %s247, %s247
                $region94: #{nstepkl_bayesian_linear_forward.1} parent=83 // loop_header_branch
                  %317 = sbr.rel (%p315) target = $region98
                $region95: #{nstepkl_bayesian_linear_forward.1} parent=83 // loop_body
                  %v321 = vld [vmem:[%s319] sm:%s312]
                  %322 = vst [vmem:[%s320] sm:%s312] %v321
                  %v323 = vld [vmem:[%s319 + $0x8] sm:%s312]
                  %324 = vst [vmem:[%s320 + $0x4] sm:%s312] %v323
                  %v325 = vld [vmem:[%s319 + $0x10] sm:%s312]
                  %326 = vst [vmem:[%s320 + $0x8] sm:%s312] %v325
                  %v327 = vld [vmem:[%s319 + $0x18] sm:%s312]
                  %328 = vst [vmem:[%s320 + $0xc] sm:%s312] %v327
                  %v329 = vld [vmem:[%s319 + $0x20] sm:%s312]
                  %330 = vst [vmem:[%s320 + $0x10] sm:%s312] %v329
                  %v331 = vld [vmem:[%s319 + $0x28] sm:%s312]
                  %332 = vst [vmem:[%s320 + $0x14] sm:%s312] %v331
                  %v333 = vld [vmem:[%s319 + $0x30] sm:%s312]
                  %334 = vst [vmem:[%s320 + $0x18] sm:%s312] %v333
                  %v335 = vld [vmem:[%s319 + $0x38] sm:%s312]
                  %336 = vst [vmem:[%s320 + $0x1c] sm:%s312] %v335
                  %v337 = vld [vmem:[%s319 + $0x40] sm:%s312]
                  %338 = vst [vmem:[%s320 + $0x20] sm:%s312] %v337
                  %v339 = vld [vmem:[%s319 + $0x48] sm:%s312]
                  %340 = vst [vmem:[%s320 + $0x24] sm:%s312] %v339
                  %v341 = vld [vmem:[%s319 + $0x50] sm:%s312]
                  %342 = vst [vmem:[%s320 + $0x28] sm:%s312] %v341
                  %v343 = vld [vmem:[%s319 + $0x58] sm:%s312]
                  %344 = vst [vmem:[%s320 + $0x2c] sm:%s312] %v343
                  %v345 = vld [vmem:[%s319 + $0x60] sm:%s312]
                  %346 = vst [vmem:[%s320 + $0x30] sm:%s312] %v345
                  %v347 = vld [vmem:[%s319 + $0x68] sm:%s312]
                  %348 = vst [vmem:[%s320 + $0x34] sm:%s312] %v347
                  %v349 = vld [vmem:[%s319 + $0x70] sm:%s312]
                  %350 = vst [vmem:[%s320 + $0x38] sm:%s312] %v349
                  %v351 = vld [vmem:[%s319 + $0x78] sm:%s312]
                  %352 = vst [vmem:[%s320 + $0x3c] sm:%s312] %v351
                $region96: #{nstepkl_bayesian_linear_forward.1} parent=83 // loop_footer
                  %s318 = sadd.s32 1, %s314
                $region97: #{nstepkl_bayesian_linear_forward.1} parent=83 // loop_footer_branch
                  %313 = sbr.rel target = $region93
                $region98: #{nstepkl_bayesian_linear_forward.1} parent=83 // loop_exit
                  _
              $region84: #{nstepkl_bayesian_linear_forward.1} parent=68 // pred_fallthru
                _
            $region69: #{nstepkl_bayesian_linear_forward.1} parent=64 // pred_fallthru
              _
            // Predicated region
            $region70: #{nstepkl_bayesian_linear_forward.1} parent=64 // pred_check
              _
            $region71: #{nstepkl_bayesian_linear_forward.1} parent=64 // pred_check_branch
              %258 = sbr.rel (0) target = $region73
            $region72: #{nstepkl_bayesian_linear_forward.1} parent=64 // pred_region
              %s260 = ssub.s32 16, 1
              loop: start=0, step=1, limit=1
              $region74: #{nstepkl_bayesian_linear_forward.1} parent=72 // loop_pre_header
                _
              $region75: #{nstepkl_bayesian_linear_forward.1} parent=72 // loop_header
                %s262 = sphi 0, %s266
                %p263 = scmp.ge.s32.totalorder %s262, 1
                %s267 = sphi %s252, %s252
                %s268 = sphi %s247, %s247
              $region76: #{nstepkl_bayesian_linear_forward.1} parent=72 // loop_header_branch
                %265 = sbr.rel (%p263) target = $region80
              $region77: #{nstepkl_bayesian_linear_forward.1} parent=72 // loop_body
                %v269 = vld [vmem:[%s267] sm:%s260]
                %270 = vst [vmem:[%s268] sm:%s260] %v269
                %v271 = vld [vmem:[%s267 + $0x8] sm:%s260]
                %272 = vst [vmem:[%s268 + $0x4] sm:%s260] %v271
                %v273 = vld [vmem:[%s267 + $0x10] sm:%s260]
                %274 = vst [vmem:[%s268 + $0x8] sm:%s260] %v273
                %v275 = vld [vmem:[%s267 + $0x18] sm:%s260]
                %276 = vst [vmem:[%s268 + $0xc] sm:%s260] %v275
                %v277 = vld [vmem:[%s267 + $0x20] sm:%s260]
                %278 = vst [vmem:[%s268 + $0x10] sm:%s260] %v277
                %v279 = vld [vmem:[%s267 + $0x28] sm:%s260]
                %280 = vst [vmem:[%s268 + $0x14] sm:%s260] %v279
                %v281 = vld [vmem:[%s267 + $0x30] sm:%s260]
                %282 = vst [vmem:[%s268 + $0x18] sm:%s260] %v281
                %v283 = vld [vmem:[%s267 + $0x38] sm:%s260]
                %284 = vst [vmem:[%s268 + $0x1c] sm:%s260] %v283
                %v285 = vld [vmem:[%s267 + $0x40] sm:%s260]
                %286 = vst [vmem:[%s268 + $0x20] sm:%s260] %v285
                %v287 = vld [vmem:[%s267 + $0x48] sm:%s260]
                %288 = vst [vmem:[%s268 + $0x24] sm:%s260] %v287
                %v289 = vld [vmem:[%s267 + $0x50] sm:%s260]
                %290 = vst [vmem:[%s268 + $0x28] sm:%s260] %v289
                %v291 = vld [vmem:[%s267 + $0x58] sm:%s260]
                %292 = vst [vmem:[%s268 + $0x2c] sm:%s260] %v291
                %v293 = vld [vmem:[%s267 + $0x60] sm:%s260]
                %294 = vst [vmem:[%s268 + $0x30] sm:%s260] %v293
                %v295 = vld [vmem:[%s267 + $0x68] sm:%s260]
                %296 = vst [vmem:[%s268 + $0x34] sm:%s260] %v295
                %v297 = vld [vmem:[%s267 + $0x70] sm:%s260]
                %298 = vst [vmem:[%s268 + $0x38] sm:%s260] %v297
                %v299 = vld [vmem:[%s267 + $0x78] sm:%s260]
                %300 = vst [vmem:[%s268 + $0x3c] sm:%s260] %v299
              $region78: #{nstepkl_bayesian_linear_forward.1} parent=72 // loop_footer
                %s266 = sadd.s32 1, %s262
              $region79: #{nstepkl_bayesian_linear_forward.1} parent=72 // loop_footer_branch
                %261 = sbr.rel target = $region75
              $region80: #{nstepkl_bayesian_linear_forward.1} parent=72 // loop_exit
                _
            $region73: #{nstepkl_bayesian_linear_forward.1} parent=64 // pred_fallthru
              _
          $region65: #{nstepkl_bayesian_linear_forward.1} parent=60 // pred_fallthru
            _
          %353 = vnop
        $region61: #{nstepkl_bayesian_linear_forward.1} parent=15 // pred_fallthru
          _
        // Predicated region
        $region99: #{nstepkl_bayesian_linear_forward.1} parent=15 // pred_check
          %p354 = pneg %p107
        $region100: #{nstepkl_bayesian_linear_forward.1} parent=15 // pred_check_branch
          %356 = sbr.rel (%p354) target = $region102
        $region101: #{nstepkl_bayesian_linear_forward.1} parent=15 // pred_region
          %p357 = scmp.lt.s32.totalorder %s20, 1
          %s358 = scalar_select %p357, %s20, 1
          %s359 = scalar_lea.vmem %s2, %s358
        $region102: #{nstepkl_bayesian_linear_forward.1} parent=15 // pred_fallthru
          _
      $region16: #{nstepkl_bayesian_linear_forward.1} parent=5 // pred_fallthru
        _
      %p360 = scmp.le.s32.totalorder 1, %s12
      %p361 = scmp.lt.s32.totalorder %s12, 9
      %p362 = pnand %p360, %p361
      %p363 = pneg %p362
      // Predicated region
      $region103: #{nstepkl_bayesian_linear_forward.1} parent=5 // pred_check
        _
      $region104: #{nstepkl_bayesian_linear_forward.1} parent=5 // pred_check_branch
        %365 = sbr.rel (%p362) target = $region106
      $region105: #{nstepkl_bayesian_linear_forward.1} parent=5 // pred_region
        %s366 = ssub.s32 %s12, 1
        %s367 = sand.u32 %s46, 1
        %s368 = sand.u32 %s46, 1
        %s369 = smul.addr %s368, 32
        %s370 = scalar_lea.vmem [#allocation2], %s369
        // Predicated region
        $region107: #{nstepkl_bayesian_linear_forward.1} parent=105 // pred_check
          %p371 = pneg %p59
        $region108: #{nstepkl_bayesian_linear_forward.1} parent=105 // pred_check_branch
          %373 = sbr.rel (%p371) target = $region110
        $region109: #{nstepkl_bayesian_linear_forward.1} parent=105 // pred_region
          _
        $region110: #{nstepkl_bayesian_linear_forward.1} parent=105 // pred_fallthru
          _
        %s374 = sand.u32 %s74, 1
        %s375 = sand.u32 %s74, 1
        %s376 = smul.addr %s375, 64
        %s377 = scalar_lea.vmem [#allocation3], %s376
        // Predicated region
        $region111: #{nstepkl_bayesian_linear_forward.1} parent=105 // pred_check
          %p378 = pneg %p87
        $region112: #{nstepkl_bayesian_linear_forward.1} parent=105 // pred_check_branch
          %380 = sbr.rel (%p378) target = $region114
        $region113: #{nstepkl_bayesian_linear_forward.1} parent=105 // pred_region
          _
        $region114: #{nstepkl_bayesian_linear_forward.1} parent=105 // pred_fallthru
          _
        %s381 = sand.u32 %s46, 1
        %s382 = sand.u32 %s46, 1
        %s383 = smul.addr %s382, 32
        %s384 = scalar_lea.vmem [#allocation2], %s383
        %p385 = pneg %p59
        %p386 = pneg %p56
        %s387 = sand.u32 %s74, 1
        %s388 = sand.u32 %s74, 1
        %s389 = smul.addr %s388, 64
        %s390 = scalar_lea.vmem [#allocation3], %s389
        %p391 = pneg %p87
        %p392 = pneg %p84
        %p393 = scmp.lt.s32.totalorder %s23, 1
        %s394 = scalar_select %p393, %s23, 1
        %s395 = scalar_lea.vmem %s2, %s394
        %p396 = pneg %p113
        %p397 = pneg %p110
        %p398 = pneg %p141
        %p399 = pneg %p138
        %s400 = sand.u32 %s128, 1
        %s401 = scalar_lea.sflag [#allocation5], %s400
        %s402 = sand.u32 %s128, 1
        %s403 = smul.addr %s402, 64
        %s404 = scalar_lea.vmem [#allocation4], %s403
        %s405 = smul.u32 8, %s22
        %s406 = smul.u32 16, %s24
        %p407 = scmp.lt.s32.totalorder %s23, 1
        %s408 = scalar_select %p407, %s23, 1
        %s409 = scalar_lea.vmem %s2, %s408
        %s410 = smul.u32 8, %s22
        %p411 = scmp.eq.s32.totalorder %s24, 0
        // Predicated region
        $region115: #{nstepkl_bayesian_linear_forward.1} parent=105 // pred_check
          %p412 = pneg %p411
        $region116: #{nstepkl_bayesian_linear_forward.1} parent=105 // pred_check_branch
          %414 = sbr.rel (%p412) target = $region118
        $region117: #{nstepkl_bayesian_linear_forward.1} parent=105 // pred_region
          %415 = vst [vmem:[%s404] sm:$0xff] 0.0
          %416 = vst [vmem:[%s404 + $0x8] sm:$0xff] 0.0
          %417 = vst [vmem:[%s404 + $0x10] sm:$0xff] 0.0
          %418 = vst [vmem:[%s404 + $0x18] sm:$0xff] 0.0
          %419 = vst [vmem:[%s404 + $0x20] sm:$0xff] 0.0
          %420 = vst [vmem:[%s404 + $0x28] sm:$0xff] 0.0
          %421 = vst [vmem:[%s404 + $0x30] sm:$0xff] 0.0
          %422 = vst [vmem:[%s404 + $0x38] sm:$0xff] 0.0
        $region118: #{nstepkl_bayesian_linear_forward.1} parent=105 // pred_fallthru
          _
        %v423 = vld [vmem:[%s404] sm:$0xff]
        %v424 = vld [vmem:[%s404 + $0x8] sm:$0xff]
        %v425 = vld [vmem:[%s404 + $0x10] sm:$0xff]
        %v426 = vld [vmem:[%s404 + $0x18] sm:$0xff]
        %v427 = vld [vmem:[%s404 + $0x20] sm:$0xff]
        %v428 = vld [vmem:[%s404 + $0x28] sm:$0xff]
        %v429 = vld [vmem:[%s404 + $0x30] sm:$0xff]
        %v430 = vld [vmem:[%s404 + $0x38] sm:$0xff]
        %v431 = vld [vmem:[%s370] sm:$0xf]
        %v432 = vld [vmem:[%s370 + $0x4] sm:$0xf]
        %v433 = vld [vmem:[%s370 + $0x8] sm:$0xf]
        %v434 = vld [vmem:[%s370 + $0xc] sm:$0xf]
        %v435 = vld [vmem:[%s370 + $0x10] sm:$0xf]
        %v436 = vld [vmem:[%s370 + $0x14] sm:$0xf]
        %v437 = vld [vmem:[%s370 + $0x18] sm:$0xf]
        %v438 = vld [vmem:[%s370 + $0x1c] sm:$0xf]
        %v439 = vld [vmem:[%s377] sm:$0xf]
        %v440 = vld [vmem:[%s377 + $0x4] sm:$0xf]
        %v441 = vld [vmem:[%s377 + $0x8] sm:$0xf]
        %v442 = vld [vmem:[%s377 + $0xc] sm:$0xf]
        %v443 = vld [vmem:[%s377 + $0x10] sm:$0xf]
        %v444 = vld [vmem:[%s377 + $0x14] sm:$0xf]
        %v445 = vld [vmem:[%s377 + $0x18] sm:$0xf]
        %v446 = vld [vmem:[%s377 + $0x1c] sm:$0xf]
        %v447 = vld [vmem:[%s377 + $0x20] sm:$0xf]
        %v448 = vld [vmem:[%s377 + $0x24] sm:$0xf]
        %v449 = vld [vmem:[%s377 + $0x28] sm:$0xf]
        %v450 = vld [vmem:[%s377 + $0x2c] sm:$0xf]
        %v451 = vld [vmem:[%s377 + $0x30] sm:$0xf]
        %v452 = vld [vmem:[%s377 + $0x34] sm:$0xf]
        %v453 = vld [vmem:[%s377 + $0x38] sm:$0xf]
        %v454 = vld [vmem:[%s377 + $0x3c] sm:$0xf]
        %v463 = vunpack.c.l.b16 %v431
        %v464 = vunpack.c.l.b16 %v432
        %v465 = vunpack.c.l.b16 %v433
        %v466 = vunpack.c.l.b16 %v434
        %v467 = vunpack.c.l.b16 %v435
        %v468 = vunpack.c.l.b16 %v436
        %v469 = vunpack.c.l.b16 %v437
        %v470 = vunpack.c.l.b16 %v438
        %v471 = vpack.c.b16 %v464, %v463
        %v472 = vpack.c.b16 %v466, %v465
        %v473 = vpack.c.b16 %v468, %v467
        %v474 = vpack.c.b16 %v470, %v469
        %v495 = vunpack.c.l.b16 %v439
        %v496 = vunpack.c.l.b16 %v440
        %v497 = vunpack.c.l.b16 %v441
        %v498 = vunpack.c.l.b16 %v442
        %v499 = vunpack.c.l.b16 %v443
        %v500 = vunpack.c.l.b16 %v444
        %v501 = vunpack.c.l.b16 %v445
        %v502 = vunpack.c.l.b16 %v446
        %v503 = vunpack.c.l.b16 %v447
        %v504 = vunpack.c.l.b16 %v448
        %v505 = vunpack.c.l.b16 %v449
        %v506 = vunpack.c.l.b16 %v450
        %v507 = vunpack.c.l.b16 %v451
        %v508 = vunpack.c.l.b16 %v452
        %v509 = vunpack.c.l.b16 %v453
        %v510 = vunpack.c.l.b16 %v454
        %v511 = vpack.c.b16 %v496, %v495
        %v512 = vpack.c.b16 %v498, %v497
        %v513 = vpack.c.b16 %v500, %v499
        %v514 = vpack.c.b16 %v502, %v501
        %v515 = vpack.c.b16 %v504, %v503
        %v516 = vpack.c.b16 %v506, %v505
        %v517 = vpack.c.b16 %v508, %v507
        %v518 = vpack.c.b16 %v510, %v509
        %527 = vmatpush.bf16.msra.mxu0 %v518
        %528 = vmatpush.bf16.msra.mxu0 %v517
        %529 = vmatpush.bf16.msra.mxu0 %v516
        %530 = vmatpush.bf16.msra.mxu0 %v515
        %531 = vmatpush.bf16.msra.mxu0 %v514
        %532 = vmatpush.bf16.msra.mxu0 %v513
        %533 = vmatpush.bf16.msra.mxu0 %v512
        %534 = vmatpush.bf16.msra.mxu0 %v511
        %535 = vmatmul.bf16.gmra.mxu0 %v471
        %v536 = vpop.f32.mrf.mxu0
        %v537 = vadd.f32 0.0, %v536
        %v538 = vpop.f32.mrf.mxu0
        %v539 = vadd.f32 0.0, %v538
        %540 = vmatmul.bf16.gmra.mxu0 %v472
        %v541 = vpop.f32.mrf.mxu0
        %v542 = vadd.f32 0.0, %v541
        %v543 = vpop.f32.mrf.mxu0
        %v544 = vadd.f32 0.0, %v543
        %545 = vmatmul.bf16.gmra.mxu0 %v473
        %v546 = vpop.f32.mrf.mxu0
        %v547 = vadd.f32 0.0, %v546
        %v548 = vpop.f32.mrf.mxu0
        %v549 = vadd.f32 0.0, %v548
        %550 = vmatmul.bf16.gmra.mxu0 %v474
        %v551 = vpop.f32.mrf.mxu0
        %v552 = vadd.f32 0.0, %v551
        %v553 = vpop.f32.mrf.mxu0
        %v554 = vadd.f32 0.0, %v553
        %555 = vdwg.mxu0
        %v556 = vadd.f32 %v423, %v537
        %v557 = vadd.f32 %v424, %v539
        %v558 = vadd.f32 %v425, %v542
        %v559 = vadd.f32 %v426, %v544
        %v560 = vadd.f32 %v427, %v547
        %v561 = vadd.f32 %v428, %v549
        %v562 = vadd.f32 %v429, %v552
        %v563 = vadd.f32 %v430, %v554
        %564 = vst [vmem:[%s404] sm:$0xff] %v556
        %565 = vst [vmem:[%s404 + $0x8] sm:$0xff] %v557
        %566 = vst [vmem:[%s404 + $0x10] sm:$0xff] %v558
        %567 = vst [vmem:[%s404 + $0x18] sm:$0xff] %v559
        %568 = vst [vmem:[%s404 + $0x20] sm:$0xff] %v560
        %569 = vst [vmem:[%s404 + $0x28] sm:$0xff] %v561
        %570 = vst [vmem:[%s404 + $0x30] sm:$0xff] %v562
        %571 = vst [vmem:[%s404 + $0x38] sm:$0xff] %v563
        %p572 = scmp.eq.s32.totalorder %s24, 1
        // Predicated region
        $region119: #{nstepkl_bayesian_linear_forward.1} parent=105 // pred_check
          %p573 = pneg %p572
        $region120: #{nstepkl_bayesian_linear_forward.1} parent=105 // pred_check_branch
          %575 = sbr.rel (%p573) target = $region122
        $region121: #{nstepkl_bayesian_linear_forward.1} parent=105 // pred_region
          %v576 = vld [vmem:[%s404] sm:$0xff]
          %v577 = vld [vmem:[%s404 + $0x8] sm:$0xff]
          %v578 = vld [vmem:[%s404 + $0x10] sm:$0xff]
          %v579 = vld [vmem:[%s404 + $0x18] sm:$0xff]
          %v580 = vld [vmem:[%s404 + $0x20] sm:$0xff]
          %v581 = vld [vmem:[%s404 + $0x28] sm:$0xff]
          %v582 = vld [vmem:[%s404 + $0x30] sm:$0xff]
          %v583 = vld [vmem:[%s404 + $0x38] sm:$0xff]
          %v584 = vld [vmem:[%s409] sm:$0x1]
          %v586 = vperm.slane %v584, 0
          %v588 = vadd.f32 %v576, %v586
          %v589 = vadd.f32 %v577, %v586
          %v590 = vadd.f32 %v578, %v586
          %v591 = vadd.f32 %v579, %v586
          %v592 = vadd.f32 %v580, %v586
          %v593 = vadd.f32 %v581, %v586
          %v594 = vadd.f32 %v582, %v586
          %v595 = vadd.f32 %v583, %v586
          %596 = vst [vmem:[%s404] sm:$0xff] %v588
          %597 = vst [vmem:[%s404 + $0x8] sm:$0xff] %v589
          %598 = vst [vmem:[%s404 + $0x10] sm:$0xff] %v590
          %599 = vst [vmem:[%s404 + $0x18] sm:$0xff] %v591
          %600 = vst [vmem:[%s404 + $0x20] sm:$0xff] %v592
          %601 = vst [vmem:[%s404 + $0x28] sm:$0xff] %v593
          %602 = vst [vmem:[%s404 + $0x30] sm:$0xff] %v594
          %603 = vst [vmem:[%s404 + $0x38] sm:$0xff] %v595
        $region122: #{nstepkl_bayesian_linear_forward.1} parent=105 // pred_fallthru
          _
        %s604 = sand.u32 %s128, 1
        %s605 = scalar_lea.sflag [#allocation5], %s604
        %s606 = sand.u32 %s128, 1
        %s607 = smul.addr %s606, 64
        %s608 = scalar_lea.vmem [#allocation4], %s607
        // Predicated region
        $region123: #{nstepkl_bayesian_linear_forward.1} parent=105 // pred_check
          %p609 = pneg %p138
        $region124: #{nstepkl_bayesian_linear_forward.1} parent=105 // pred_check_branch
          %611 = sbr.rel (%p609) target = $region126
        $region125: #{nstepkl_bayesian_linear_forward.1} parent=105 // pred_region
          %s612 = smul.u32 8, %s22
          %614 = vsyncadd %s605, 0
          %s615 = smul.addr %s612, 2
          %s616 = sadd.s32 %s23, %s615
          %s617 = smul.addr %s616, 8
          %s618 = scalar_lea.hbm %s3, %s617
          %s619 = sshll.u32 %s608, 4
          %s620 = int_to_ptr.vmem [resolvable:$true] %s619
          %s621 = sshll.u32 %s618, 4
          %s622 = int_to_ptr.hbm [resolvable:$true] %s621
          %627 = dma.vmem_to_hbm [thread:$0]  %s620, 1024, %s622, %s605, 128, 256, 8
        $region126: #{nstepkl_bayesian_linear_forward.1} parent=105 // pred_fallthru
          _
      $region106: #{nstepkl_bayesian_linear_forward.1} parent=5 // pred_fallthru
        _
      %p628 = scmp.le.s32.totalorder 2, %s12
      // Predicated region
      $region127: #{nstepkl_bayesian_linear_forward.1} parent=5 // pred_check
        %p629 = pneg %p628
      $region128: #{nstepkl_bayesian_linear_forward.1} parent=5 // pred_check_branch
        %631 = sbr.rel (%p629) target = $region130
      $region129: #{nstepkl_bayesian_linear_forward.1} parent=5 // pred_region
        %s632 = ssub.s32 %s12, 2
        // Predicated region
        $region131: #{nstepkl_bayesian_linear_forward.1} parent=129 // pred_check
          %p633 = pneg %p144
        $region132: #{nstepkl_bayesian_linear_forward.1} parent=129 // pred_check_branch
          %635 = sbr.rel (%p633) target = $region134
        $region133: #{nstepkl_bayesian_linear_forward.1} parent=129 // pred_region
          %s636 = sand.u32 %s129, 1
          %s637 = scalar_lea.sflag [#allocation5], %s636
          %s638 = sand.u32 %s129, 1
          %s639 = smul.addr %s638, 64
          %s640 = scalar_lea.vmem [#allocation4], %s639
          %642 = dma.done %s637, 1024
        $region134: #{nstepkl_bayesian_linear_forward.1} parent=129 // pred_fallthru
          _
      $region130: #{nstepkl_bayesian_linear_forward.1} parent=5 // pred_fallthru
        _
    $region6: #{nstepkl_bayesian_linear_forward.1} parent=1 // loop_footer
      %s16 = sadd.s32 1, %s12
    $region7: #{nstepkl_bayesian_linear_forward.1} parent=1 // loop_footer_branch
      %11 = sbr.rel target = $region3
    $region8: #{nstepkl_bayesian_linear_forward.1} parent=1 // loop_exit
      _
    %643 = vsyncpa [#allocation5], 1
    %s644 = scalar_lea.sflag [#allocation5], 1
    %645 = vsyncpa %s644, 1

</llo_original>
